<compile_context>
chip_gen: v7x
topology: tpu7x:2x2x1
jax: 0.10.0
libtpu: 0.0.40
codegen_flags: <defaults>
</compile_context>

<pallas_src>
import jax
import jax.numpy as jnp
from jax.experimental import pallas as pl
from jax.experimental.pallas import tpu as pltpu

Z_DIM = 100          # latent dim
H_DIM = 128          # hidden dim
X_DIM = 784          # imgs.view(imgs.size(0), -1).size(1) for 28x28 MNIST
BN_EPS = 1e-5

Z_PAD = 128          # K padded to MXU / sublane granularity (zero pad: exact)
X_PAD = 896          # 7 * 128 -> lane-dense output, unmasked vst


def gen_kernel(z_ref, w1_ref, b1_ref, gamma_ref, beta_ref, w2_ref, b2_ref,
               o_ref):
    # ---- Linear 1: (B, 128) @ (128, H) + b1  (bf16 operands, f32 accum) ----
    h = jnp.dot(z_ref[...], w1_ref[...],
                preferred_element_type=jnp.float32) + b1_ref[...]

    # ---- BatchNorm1d (training mode: batch stats, biased variance) ----
    # Folded affine: compute scale/shift once on a (1, H) row, then a single
    # mul+add over the (B, H) tile.
    mean = jnp.mean(h, axis=0, keepdims=True)                     # (1, H)
    var = jnp.mean((h - mean) * (h - mean), axis=0, keepdims=True)
    scale = jax.lax.rsqrt(var + BN_EPS) * gamma_ref[...]          # (1, H)
    shift = beta_ref[...] - mean * scale                          # (1, H)
    h = h * scale + shift

    # ---- ReLU ----
    h = jnp.maximum(h, 0.0)

    # ---- Linear 2: (B, H) @ (H, 896) + b2  (bf16 operands, f32 accum) ----
    y = jnp.dot(h.astype(jnp.bfloat16), w2_ref[...],
                preferred_element_type=jnp.float32) + b2_ref[...]

    # ---- Sigmoid ----
    o_ref[...] = jax.nn.sigmoid(y)


def gen_forward(z, w1, b1, gamma, beta, w2, b2):
    B = z.shape[0]

    # Pad K: 100 -> 128 (zero padding contributes 0 to the dot -> exact),
    # cast matmul operands to bf16 (f32 accumulation happens in the kernel).
    z_p = jnp.pad(z, ((0, 0), (0, Z_PAD - Z_DIM))).astype(jnp.bfloat16)
    w1_p = jnp.pad(w1, ((0, Z_PAD - Z_DIM), (0, 0))).astype(jnp.bfloat16)
    # Pad N: 784 -> 896 so the output / w2 last dim is a clean multiple of 128.
    w2_p = jnp.pad(w2, ((0, 0), (0, X_PAD - X_DIM))).astype(jnp.bfloat16)
    b2_p = jnp.pad(b2, ((0, 0), (0, X_PAD - X_DIM)))

    flops = 2 * B * (Z_PAD * H_DIM + H_DIM * X_PAD) + 8 * B * H_DIM + 2 * B * X_PAD
    transcendentals = B * X_PAD + H_DIM          # sigmoid + rsqrt
    bytes_accessed = (z_p.size * 2 + w1_p.size * 2 + w2_p.size * 2
                      + (b1.size + gamma.size + beta.size + b2_p.size) * 4
                      + B * X_PAD * 4)

    out = pl.pallas_call(
        gen_kernel,
        out_shape=jax.ShapeDtypeStruct((B, X_PAD), jnp.float32),
        in_specs=[
            pl.BlockSpec(memory_space=pltpu.VMEM),   # z (padded, bf16)
            pl.BlockSpec(memory_space=pltpu.VMEM),   # w1 (padded, bf16)
            pl.BlockSpec(memory_space=pltpu.VMEM),   # b1
            pl.BlockSpec(memory_space=pltpu.VMEM),   # gamma
            pl.BlockSpec(memory_space=pltpu.VMEM),   # beta
            pl.BlockSpec(memory_space=pltpu.VMEM),   # w2 (padded, bf16)
            pl.BlockSpec(memory_space=pltpu.VMEM),   # b2 (padded)
        ],
        out_specs=pl.BlockSpec(memory_space=pltpu.VMEM),
        cost_estimate=pl.CostEstimate(
            flops=flops,
            transcendentals=transcendentals,
            bytes_accessed=bytes_accessed),
    )(z_p, w1_p, b1, gamma, beta, w2_p, b2_p)

    # Drop the lane-padding columns.
    return out[:, :X_DIM]


def init_params(key):
    """Deterministic init mimicking PyTorch defaults (uniform +-1/sqrt(fan_in))."""
    k1, k2, k3, k4, _ = jax.random.split(key, 5)
    bound1 = 1.0 / (Z_DIM ** 0.5)
    bound2 = 1.0 / (H_DIM ** 0.5)
    w1 = jax.random.uniform(k1, (Z_DIM, H_DIM), jnp.float32, -bound1, bound1)
    b1 = jax.random.uniform(k2, (1, H_DIM), jnp.float32, -bound1, bound1)
    gamma = jnp.ones((1, H_DIM), jnp.float32)   # BatchNorm1d weight init
    beta = jnp.zeros((1, H_DIM), jnp.float32)   # BatchNorm1d bias init
    w2 = jax.random.uniform(k3, (H_DIM, X_DIM), jnp.float32, -bound2, bound2)
    b2 = jax.random.uniform(k4, (1, X_DIM), jnp.float32, -bound2, bound2)
    return w1, b1, gamma, beta, w2, b2


def reference_forward(z, w1, b1, gamma, beta, w2, b2):
    """Plain-JAX reference using the same bf16 rounding as the kernel."""
    z_b = z.astype(jnp.bfloat16).astype(jnp.float32)
    w1_b = w1.astype(jnp.bfloat16).astype(jnp.float32)
    w2_b = w2.astype(jnp.bfloat16).astype(jnp.float32)
    h = z_b @ w1_b + b1
    mean = h.mean(0, keepdims=True)
    var = ((h - mean) ** 2).mean(0, keepdims=True)
    h = (h - mean) / jnp.sqrt(var + BN_EPS) * gamma + beta
    h = jnp.maximum(h, 0.0)
    h_b = h.astype(jnp.bfloat16).astype(jnp.float32)
    return jax.nn.sigmoid(h_b @ w2_b + b2)


if __name__ == "__main__":
    key = jax.random.PRNGKey(0)
    k_params, k_z = jax.random.split(key)

    B = 8
    params = init_params(k_params)
    z = jax.random.normal(k_z, (B, Z_DIM), jnp.float32)

    out = jax.block_until_ready(gen_forward(z, *params))

    ref = reference_forward(z, *params)
    assert out.shape == (B, X_DIM)
    assert jnp.allclose(out, ref, atol=1e-3, rtol=1e-3), "mismatch vs reference"

    print("KERNEL_OK")
</pallas_src>

<mosaic_0001>
module attributes {stable_mosaic.version = 11 : i64} {
  func.func @gen_kernel(%arg0: memref<8x128xbf16, #tpu.memory_space<vmem>>, %arg1: memref<128x128xbf16, #tpu.memory_space<vmem>>, %arg2: memref<1x128xf32, #tpu.memory_space<vmem>>, %arg3: memref<1x128xf32, #tpu.memory_space<vmem>>, %arg4: memref<1x128xf32, #tpu.memory_space<vmem>>, %arg5: memref<128x896xbf16, #tpu.memory_space<vmem>>, %arg6: memref<1x896xf32, #tpu.memory_space<vmem>>, %arg7: memref<8x896xf32, #tpu.memory_space<vmem>>) attributes {dimension_semantics = [], scalar_prefetch = 0 : i64, scratch_operands = 0 : i64, tpu.core_type = #tpu.core_type<tc>} {
    %c0 = arith.constant 0 : index
    %c0_0 = arith.constant 0 : index
    %0 = vector.load %arg0[%c0, %c0_0] : memref<8x128xbf16, #tpu.memory_space<vmem>>, vector<8x128xbf16>
    %c0_1 = arith.constant 0 : index
    %c0_2 = arith.constant 0 : index
    %1 = vector.load %arg1[%c0_1, %c0_2] : memref<128x128xbf16, #tpu.memory_space<vmem>>, vector<128x128xbf16>
    %cst = arith.constant dense<0.000000e+00> : vector<8x128xf32>
    %2 = tpu.matmul %0, %1, %cst {dimension_numbers = #tpu.dot_dimension_numbers<[1], [0], [0], [1], [0, 0, 1, 1], [], []>} : vector<8x128xbf16>, vector<128x128xbf16>, vector<8x128xf32> -> vector<8x128xf32>
    %c0_3 = arith.constant 0 : index
    %c0_4 = arith.constant 0 : index
    %3 = vector.load %arg2[%c0_3, %c0_4] : memref<1x128xf32, #tpu.memory_space<vmem>>, vector<1x128xf32>
    %4 = vector.broadcast %3 : vector<1x128xf32> to vector<8x128xf32>
    %5 = arith.addf %2, %4 : vector<8x128xf32>
    %cst_5 = arith.constant dense<0.000000e+00> : vector<128xf32>
    %6 = vector.multi_reduction <add>, %5, %cst_5 [0] : vector<8x128xf32> to vector<128xf32>
    %7 = vector.shape_cast %6 : vector<128xf32> to vector<1x128xf32>
    %cst_6 = arith.constant 8.000000e+00 : f32
    %8 = vector.broadcast %cst_6 : f32 to vector<1x128xf32>
    %9 = arith.divf %7, %8 : vector<1x128xf32>
    %10 = vector.broadcast %9 : vector<1x128xf32> to vector<8x128xf32>
    %11 = arith.subf %5, %10 : vector<8x128xf32>
    %12 = vector.broadcast %9 : vector<1x128xf32> to vector<8x128xf32>
    %13 = arith.subf %5, %12 : vector<8x128xf32>
    %14 = arith.mulf %11, %13 : vector<8x128xf32>
    %cst_7 = arith.constant dense<0.000000e+00> : vector<128xf32>
    %15 = vector.multi_reduction <add>, %14, %cst_7 [0] : vector<8x128xf32> to vector<128xf32>
    %16 = vector.shape_cast %15 : vector<128xf32> to vector<1x128xf32>
    %cst_8 = arith.constant 8.000000e+00 : f32
    %17 = vector.broadcast %cst_8 : f32 to vector<1x128xf32>
    %18 = arith.divf %16, %17 : vector<1x128xf32>
    %cst_9 = arith.constant 9.99999974E-6 : f32
    %19 = vector.broadcast %cst_9 : f32 to vector<1x128xf32>
    %20 = arith.addf %18, %19 : vector<1x128xf32>
    %21 = math.rsqrt %20 : vector<1x128xf32>
    %c0_10 = arith.constant 0 : index
    %c0_11 = arith.constant 0 : index
    %22 = vector.load %arg3[%c0_10, %c0_11] : memref<1x128xf32, #tpu.memory_space<vmem>>, vector<1x128xf32>
    %23 = arith.mulf %21, %22 : vector<1x128xf32>
    %c0_12 = arith.constant 0 : index
    %c0_13 = arith.constant 0 : index
    %24 = vector.load %arg4[%c0_12, %c0_13] : memref<1x128xf32, #tpu.memory_space<vmem>>, vector<1x128xf32>
    %25 = arith.mulf %9, %23 : vector<1x128xf32>
    %26 = arith.subf %24, %25 : vector<1x128xf32>
    %27 = vector.broadcast %23 : vector<1x128xf32> to vector<8x128xf32>
    %28 = arith.mulf %5, %27 : vector<8x128xf32>
    %29 = vector.broadcast %26 : vector<1x128xf32> to vector<8x128xf32>
    %30 = arith.addf %28, %29 : vector<8x128xf32>
    %cst_14 = arith.constant 0.000000e+00 : f32
    %31 = vector.broadcast %cst_14 : f32 to vector<8x128xf32>
    %32 = arith.maximumf %30, %31 : vector<8x128xf32>
    %33 = arith.truncf %32 : vector<8x128xf32> to vector<8x128xbf16>
    %c0_15 = arith.constant 0 : index
    %c0_16 = arith.constant 0 : index
    %34 = vector.load %arg5[%c0_15, %c0_16] : memref<128x896xbf16, #tpu.memory_space<vmem>>, vector<128x896xbf16>
    %cst_17 = arith.constant dense<0.000000e+00> : vector<8x896xf32>
    %35 = tpu.matmul %33, %34, %cst_17 {dimension_numbers = #tpu.dot_dimension_numbers<[1], [0], [0], [1], [0, 0, 1, 1], [], []>} : vector<8x128xbf16>, vector<128x896xbf16>, vector<8x896xf32> -> vector<8x896xf32>
    %c0_18 = arith.constant 0 : index
    %c0_19 = arith.constant 0 : index
    %36 = vector.load %arg6[%c0_18, %c0_19] : memref<1x896xf32, #tpu.memory_space<vmem>>, vector<1x896xf32>
    %37 = vector.broadcast %36 : vector<1x896xf32> to vector<8x896xf32>
    %38 = arith.addf %35, %37 : vector<8x896xf32>
    %39 = arith.negf %38 : vector<8x896xf32>
    %40 = math.exp %39 : vector<8x896xf32>
    %cst_20 = arith.constant 1.000000e+00 : f32
    %41 = vector.broadcast %cst_20 : f32 to vector<8x896xf32>
    %42 = arith.addf %41, %40 : vector<8x896xf32>
    %43 = arith.divf %41, %42 : vector<8x896xf32>
    %c0_21 = arith.constant 0 : index
    %c0_22 = arith.constant 0 : index
    %44 = vector.load %arg7[%c0_21, %c0_22] : memref<8x896xf32, #tpu.memory_space<vmem>>, vector<8x896xf32>
    tpu.vector_store %arg7[%c0_21, %c0_22], %43 {strides = array<i32>} : memref<8x896xf32, #tpu.memory_space<vmem>>, vector<8x896xf32>,
    return
  }
}

</mosaic_0001>

<llo_original>
// kernel: tpu_custom_call.1
$region0: #{tpu_custom_call.1}
  #allocation0 [shape = 'u32[]', space=smem, size = 0x4, offset = 0x4, fixed_abs, tag = 'smem constant byte address 0x4 - core index']
  #allocation1 [shape = 'u32[144,128]{1,0:T(1,128)}', space=vmem, size = 0x12000, scoped, tag = 'internal scratch']
  %s0 = inlined_call_operand.hbm [shape: bf16[8,128], index: 0, kind: input, shape index: {}]
  %s1 = inlined_call_operand.hbm [shape: bf16[128,128], index: 1, kind: input, shape index: {}]
  %s2 = inlined_call_operand.vmem [shape: f32[1,128], index: 2, kind: input, shape index: {}]
  %s3 = inlined_call_operand.vmem [shape: f32[1,128], index: 3, kind: input, shape index: {}]
  %s4 = inlined_call_operand.vmem [shape: f32[1,128], index: 4, kind: input, shape index: {}]
  %s5 = inlined_call_operand.hbm [shape: bf16[128,896], index: 5, kind: input, shape index: {}]
  %s6 = inlined_call_operand.vmem [shape: f32[1,896], index: 6, kind: input, shape index: {}]
  %s7 = inlined_call_operand.hbm [shape: f32[8,896], index: 7, kind: output, shape index: {}]
  %s8 = sld [smem:[#allocation0]]
  $region50: #{tpu_custom_call.1} parent=0
    _
  %s10 = ssub.s32 1, %s8
  %s11 = scalar_select 0, %s10, %s8
  $region1: #{tpu_custom_call.1} parent=0
    #allocation2 [shape = 'u8[2048]{0}', space=vmem, size = 0x800, scoped, tag = 'input window, operand 0, single buffered']
    #allocation3 [shape = 's32[1]{0}', space=sflag, size = 0x4, scoped, tag = 'scoped memory for tpu_custom_call.1']
    #allocation4 [shape = 's32[1]{0}', space=sflag, size = 0x4, scoped, tag = 'scoped memory for tpu_custom_call.1']
    #allocation5 [shape = 'u8[32768]{0}', space=vmem, size = 0x8000, scoped, tag = 'input window, operand 1, single buffered']
    #allocation6 [shape = 's32[1]{0}', space=sflag, size = 0x4, scoped, tag = 'scoped memory for tpu_custom_call.1']
    #allocation7 [shape = 'u8[229376]{0}', space=vmem, size = 0x38000, scoped, tag = 'input window, operand 5, single buffered']
    #allocation8 [shape = 'u8[28672]{0}', space=vmem, size = 0x7000, scoped, tag = 'output window, operand 0, single buffered']
    %12 = vsyncpa [#allocation3], 0
    %13 = vsyncpa [#allocation6], 0
    %14 = vsyncpa [#allocation4], 0
    // Predicated region
    $region2: #{tpu_custom_call.1} parent=1 // pred_check
      _
    $region3: #{tpu_custom_call.1} parent=1 // pred_check_branch
      %16 = sbr.rel (0) target = $region5
    $region4: #{tpu_custom_call.1} parent=1 // pred_region
      %s18 = ssub.s32 64, 64
      %19 = vsyncadd [#allocation3], %s18
      %s21 = sshll.u32 [#allocation2], 4
      %s22 = int_to_ptr.vmem [resolvable:$true] %s21
      %24 = dma.hbm_to_vmem [thread:$0]  %s0, 64, %s22, [#allocation3]
    $region5: #{tpu_custom_call.1} parent=1 // pred_fallthru
      _
    // Predicated region
    $region6: #{tpu_custom_call.1} parent=1 // pred_check
      _
    $region7: #{tpu_custom_call.1} parent=1 // pred_check_branch
      %26 = sbr.rel (0) target = $region9
    $region8: #{tpu_custom_call.1} parent=1 // pred_region
      %s28 = ssub.s32 1024, 1024
      %29 = vsyncadd [#allocation6], %s28
      %s30 = sshll.u32 [#allocation5], 4
      %s31 = int_to_ptr.vmem [resolvable:$true] %s30
      %36 = dma.hbm_to_vmem [thread:$0]  %s1, 1024, %s31, [#allocation6], 64, 64, 4
    $region9: #{tpu_custom_call.1} parent=1 // pred_fallthru
      _
    // Predicated region
    $region10: #{tpu_custom_call.1} parent=1 // pred_check
      _
    $region11: #{tpu_custom_call.1} parent=1 // pred_check_branch
      %38 = sbr.rel (0) target = $region13
    $region12: #{tpu_custom_call.1} parent=1 // pred_region
      _
    $region13: #{tpu_custom_call.1} parent=1 // pred_fallthru
      _
    // Predicated region
    $region14: #{tpu_custom_call.1} parent=1 // pred_check
      _
    $region15: #{tpu_custom_call.1} parent=1 // pred_check_branch
      %40 = sbr.rel (0) target = $region17
    $region16: #{tpu_custom_call.1} parent=1 // pred_region
      _
    $region17: #{tpu_custom_call.1} parent=1 // pred_fallthru
      _
    // Predicated region
    $region18: #{tpu_custom_call.1} parent=1 // pred_check
      _
    $region19: #{tpu_custom_call.1} parent=1 // pred_check_branch
      %42 = sbr.rel (0) target = $region21
    $region20: #{tpu_custom_call.1} parent=1 // pred_region
      _
    $region21: #{tpu_custom_call.1} parent=1 // pred_fallthru
      _
    // Predicated region
    $region22: #{tpu_custom_call.1} parent=1 // pred_check
      _
    $region23: #{tpu_custom_call.1} parent=1 // pred_check_branch
      %44 = sbr.rel (0) target = $region25
    $region24: #{tpu_custom_call.1} parent=1 // pred_region
      %s46 = ssub.s32 7168, 7168
      %47 = vsyncadd [#allocation6], %s46
      %s48 = sshll.u32 [#allocation7], 4
      %s49 = int_to_ptr.vmem [resolvable:$true] %s48
      %54 = dma.hbm_to_vmem [thread:$0]  %s5, 7168, %s49, [#allocation6], 448, 448, 28
    $region25: #{tpu_custom_call.1} parent=1 // pred_fallthru
      _
    // Predicated region
    $region26: #{tpu_custom_call.1} parent=1 // pred_check
      _
    $region27: #{tpu_custom_call.1} parent=1 // pred_check_branch
      %56 = sbr.rel (0) target = $region29
    $region28: #{tpu_custom_call.1} parent=1 // pred_region
      _
    $region29: #{tpu_custom_call.1} parent=1 // pred_fallthru
      _
    // Predicated region
    $region30: #{tpu_custom_call.1} parent=1 // pred_check
      _
    $region31: #{tpu_custom_call.1} parent=1 // pred_check_branch
      %58 = sbr.rel (0) target = $region33
    $region32: #{tpu_custom_call.1} parent=1 // pred_region
      %59 = dma.done [#allocation3], 64
    $region33: #{tpu_custom_call.1} parent=1 // pred_fallthru
      _
    // Predicated region
    $region34: #{tpu_custom_call.1} parent=1 // pred_check
      _
    $region35: #{tpu_custom_call.1} parent=1 // pred_check_branch
      %61 = sbr.rel (0) target = $region37
    $region36: #{tpu_custom_call.1} parent=1 // pred_region
      %62 = dma.done [#allocation6], 1024
    $region37: #{tpu_custom_call.1} parent=1 // pred_fallthru
      _
    // Predicated region
    $region38: #{tpu_custom_call.1} parent=1 // pred_check
      _
    $region39: #{tpu_custom_call.1} parent=1 // pred_check_branch
      %64 = sbr.rel (0) target = $region41
    $region40: #{tpu_custom_call.1} parent=1 // pred_region
      %65 = dma.done [#allocation6], 7168
    $region41: #{tpu_custom_call.1} parent=1 // pred_fallthru
      _
    %v67 = vld [vmem:[#allocation2] sm:$0xf]
    %v68 = vld [vmem:[#allocation5] sm:$0xf]
    %v69 = vld [vmem:[#allocation5 + $0x4] sm:$0xf]
    %v70 = vld [vmem:[#allocation5 + $0x8] sm:$0xf]
    %v71 = vld [vmem:[#allocation5 + $0xc] sm:$0xf]
    %v72 = vld [vmem:[#allocation5 + $0x10] sm:$0xf]
    %v73 = vld [vmem:[#allocation5 + $0x14] sm:$0xf]
    %v74 = vld [vmem:[#allocation5 + $0x18] sm:$0xf]
    %v75 = vld [vmem:[#allocation5 + $0x1c] sm:$0xf]
    %v76 = vld [vmem:[#allocation5 + $0x20] sm:$0xf]
    %v77 = vld [vmem:[#allocation5 + $0x24] sm:$0xf]
    %v78 = vld [vmem:[#allocation5 + $0x28] sm:$0xf]
    %v79 = vld [vmem:[#allocation5 + $0x2c] sm:$0xf]
    %v80 = vld [vmem:[#allocation5 + $0x30] sm:$0xf]
    %v81 = vld [vmem:[#allocation5 + $0x34] sm:$0xf]
    %v82 = vld [vmem:[#allocation5 + $0x38] sm:$0xf]
    %v83 = vld [vmem:[#allocation5 + $0x3c] sm:$0xf]
    %v84 = vld [vmem:[%s2] sm:$0x1]
    %v86 = vlaneseq
    %v87 = vshrl.u32 %v86, 7
    %v88 = vsub.s32 0, %v87
    %v89 = vrot.slane %v84, %v88
    %v107 = vunpack.c.l.b16 %v68
    %v108 = vunpack.c.l.b16 %v69
    %v109 = vunpack.c.l.b16 %v70
    %v110 = vunpack.c.l.b16 %v71
    %v111 = vunpack.c.l.b16 %v72
    %v112 = vunpack.c.l.b16 %v73
    %v113 = vunpack.c.l.b16 %v74
    %v114 = vunpack.c.l.b16 %v75
    %v115 = vunpack.c.l.b16 %v76
    %v116 = vunpack.c.l.b16 %v77
    %v117 = vunpack.c.l.b16 %v78
    %v118 = vunpack.c.l.b16 %v79
    %v119 = vunpack.c.l.b16 %v80
    %v120 = vunpack.c.l.b16 %v81
    %v121 = vunpack.c.l.b16 %v82
    %v122 = vunpack.c.l.b16 %v83
    %v123 = vpack.c.b16 %v108, %v107
    %v124 = vpack.c.b16 %v110, %v109
    %v125 = vpack.c.b16 %v112, %v111
    %v126 = vpack.c.b16 %v114, %v113
    %v127 = vpack.c.b16 %v116, %v115
    %v128 = vpack.c.b16 %v118, %v117
    %v129 = vpack.c.b16 %v120, %v119
    %v130 = vpack.c.b16 %v122, %v121
    %139 = vmatprep.subr.bf16.mxu0 0
    %140 = vmatpush1.bf16.msra.mxu0 %v123
    %141 = vmatprep.subr.bf16.mxu0 0
    %142 = vmatpush1.bf16.msra.mxu0 %v124
    %143 = vmatprep.subr.bf16.mxu0 0
    %144 = vmatpush1.bf16.msra.mxu0 %v125
    %145 = vmatprep.subr.bf16.mxu0 0
    %146 = vmatpush1.bf16.msra.mxu0 %v126
    %147 = vmatprep.subr.bf16.mxu0 0
    %148 = vmatpush1.bf16.msra.mxu0 %v127
    %149 = vmatprep.subr.bf16.mxu0 0
    %150 = vmatpush1.bf16.msra.mxu0 %v128
    %151 = vmatprep.subr.bf16.mxu0 0
    %152 = vmatpush1.bf16.msra.mxu0 %v129
    %153 = vmatprep.subr.bf16.mxu0 0
    %154 = vmatpush1.bf16.msra.mxu0 %v130
    %155 = vmatprep.subr.bf16.mxu0 0
    %156 = vmatpush1.bf16.msra.mxu0 0
    %157 = vmatprep.subr.bf16.mxu0 0
    %158 = vmatpush1.bf16.msra.mxu0 0
    %159 = vmatprep.subr.bf16.mxu0 0
    %160 = vmatpush1.bf16.msra.mxu0 0
    %161 = vmatprep.subr.bf16.mxu0 0
    %162 = vmatpush1.bf16.msra.mxu0 0
    %163 = vmatprep.subr.bf16.mxu0 0
    %164 = vmatpush1.bf16.msra.mxu0 0
    %165 = vmatprep.subr.bf16.mxu0 0
    %166 = vmatpush1.bf16.msra.mxu0 0
    %167 = vmatprep.subr.bf16.mxu0 0
    %168 = vmatpush1.bf16.msra.mxu0 0
    %169 = vmatprep.subr.bf16.mxu0 0
    %170 = vmatpush1.bf16.msra.mxu0 0
    %171 = vmatprep.mubr.bf16.mxu0 0
    %172 = vmatmul.mubr.bf16.gmra.mrb[0].mxu0 %v67
    %v173 = vpop.f32.mrb[0].mxu0
    %v174 = vadd.f32 %v89, %v173
    %v175 = vpop.f32.mrb[0].mxu0
    %v176 = vpop.f32.mrb[0].mxu0
    %v177 = vpop.f32.mrb[0].mxu0
    %178 = vdwg.mxu0
    %v179 = vrot.slane %v174, 4
    %v180 = vadd.f32 %v174, %v179
    %v181 = vrot.slane %v180, 2
    %v182 = vadd.f32 %v180, %v181
    %v183 = vrot.slane %v182, 1
    %v184 = vadd.f32 %v182, %v183
    %v185 = vrcp.pop 8.0
    %v186 = vmul.f32 %v184, %v185
    %v187 = vsub.f32 %v174, %v186
    %v188 = vmul.f32 %v187, %v187
    %v189 = vrot.slane %v188, 4
    %v190 = vadd.f32 %v188, %v189
    %v191 = vrot.slane %v190, 2
    %v192 = vadd.f32 %v190, %v191
    %v193 = vrot.slane %v192, 1
    %v194 = vadd.f32 %v192, %v193
    %v195 = vmul.f32 %v194, %v185
    %v196 = vadd.f32 %v195, 1e-05
    %v197 = vrsqrt.pop %v196
    %v198 = vld [vmem:[%s3] sm:$0x1]
    %v199 = vmul.f32 %v197, %v198
    %v200 = vld [vmem:[%s4] sm:$0x1]
    %v201 = vmul.f32 %v186, %v199
    %v202 = vsub.f32 %v200, %v201
    %v203 = vlaneseq
    %v204 = vshrl.u32 %v203, 7
    %v205 = vsub.s32 0, %v204
    %v206 = vrot.slane %v199, %v205
    %v207 = vmul.f32 %v174, %v206
    %v209 = vlaneseq
    %v210 = vshrl.u32 %v209, 7
    %v211 = vsub.s32 0, %v210
    %v212 = vrot.slane %v202, %v211
    %v214 = vadd.f32 %v207, %v212
    %v215 = vmax.f32 %v214, 0.0
    %v216 = vpack.c.bf16 %v215, %v215
    %v217 = vld [vmem:[#allocation7] sm:$0xff]
    %v218 = vld [vmem:[#allocation7 + $0x8] sm:$0xff]
    %v219 = vld [vmem:[#allocation7 + $0x10] sm:$0xff]
    %v220 = vld [vmem:[#allocation7 + $0x18] sm:$0xf]
    %v221 = vld [vmem:[#allocation7 + $0x1c] sm:$0xff]
    %v222 = vld [vmem:[#allocation7 + $0x24] sm:$0xff]
    %v223 = vld [vmem:[#allocation7 + $0x2c] sm:$0xff]
    %v224 = vld [vmem:[#allocation7 + $0x34] sm:$0xf]
    %v225 = vld [vmem:[#allocation7 + $0x38] sm:$0xff]
    %v226 = vld [vmem:[#allocation7 + $0x40] sm:$0xff]
    %v227 = vld [vmem:[#allocation7 + $0x48] sm:$0xff]
    %v228 = vld [vmem:[#allocation7 + $0x50] sm:$0xf]
    %v229 = vld [vmem:[#allocation7 + $0x54] sm:$0xff]
    %v230 = vld [vmem:[#allocation7 + $0x5c] sm:$0xff]
    %v231 = vld [vmem:[#allocation7 + $0x64] sm:$0xff]
    %v232 = vld [vmem:[#allocation7 + $0x6c] sm:$0xf]
    %v233 = vld [vmem:[#allocation7 + $0x70] sm:$0xff]
    %v234 = vld [vmem:[#allocation7 + $0x78] sm:$0xff]
    %v235 = vld [vmem:[#allocation7 + $0x80] sm:$0xff]
    %v236 = vld [vmem:[#allocation7 + $0x88] sm:$0xf]
    %v237 = vld [vmem:[#allocation7 + $0x8c] sm:$0xff]
    %v238 = vld [vmem:[#allocation7 + $0x94] sm:$0xff]
    %v239 = vld [vmem:[#allocation7 + $0x9c] sm:$0xff]
    %v240 = vld [vmem:[#allocation7 + $0xa4] sm:$0xf]
    %v241 = vld [vmem:[#allocation7 + $0xa8] sm:$0xff]
    %v242 = vld [vmem:[#allocation7 + $0xb0] sm:$0xff]
    %v243 = vld [vmem:[#allocation7 + $0xb8] sm:$0xff]
    %v244 = vld [vmem:[#allocation7 + $0xc0] sm:$0xf]
    %v245 = vld [vmem:[#allocation7 + $0xc4] sm:$0xff]
    %v246 = vld [vmem:[#allocation7 + $0xcc] sm:$0xff]
    %v247 = vld [vmem:[#allocation7 + $0xd4] sm:$0xff]
    %v248 = vld [vmem:[#allocation7 + $0xdc] sm:$0xf]
    %v249 = vld [vmem:[#allocation7 + $0xe0] sm:$0xff]
    %v250 = vld [vmem:[#allocation7 + $0xe8] sm:$0xff]
    %v251 = vld [vmem:[#allocation7 + $0xf0] sm:$0xff]
    %v252 = vld [vmem:[#allocation7 + $0xf8] sm:$0xf]
    %v253 = vld [vmem:[#allocation7 + $0xfc] sm:$0xff]
    %v254 = vld [vmem:[#allocation7 + $0x104] sm:$0xff]
    %v255 = vld [vmem:[#allocation7 + $0x10c] sm:$0xff]
    %v256 = vld [vmem:[#allocation7 + $0x114] sm:$0xf]
    %v257 = vld [vmem:[#allocation7 + $0x118] sm:$0xff]
    %v258 = vld [vmem:[#allocation7 + $0x120] sm:$0xff]
    %v259 = vld [vmem:[#allocation7 + $0x128] sm:$0xff]
    %v260 = vld [vmem:[#allocation7 + $0x130] sm:$0xf]
    %v261 = vld [vmem:[#allocation7 + $0x134] sm:$0xff]
    %v262 = vld [vmem:[#allocation7 + $0x13c] sm:$0xff]
    %v263 = vld [vmem:[#allocation7 + $0x144] sm:$0xff]
    %v264 = vld [vmem:[#allocation7 + $0x14c] sm:$0xf]
    %v265 = vld [vmem:[#allocation7 + $0x150] sm:$0xff]
    %v266 = vld [vmem:[#allocation7 + $0x158] sm:$0xff]
    %v267 = vld [vmem:[#allocation7 + $0x160] sm:$0xff]
    %v268 = vld [vmem:[#allocation7 + $0x168] sm:$0xf]
    %v269 = vld [vmem:[#allocation7 + $0x16c] sm:$0xff]
    %v270 = vld [vmem:[#allocation7 + $0x174] sm:$0xff]
    %v271 = vld [vmem:[#allocation7 + $0x17c] sm:$0xff]
    %v272 = vld [vmem:[#allocation7 + $0x184] sm:$0xf]
    %v273 = vld [vmem:[#allocation7 + $0x188] sm:$0xff]
    %v274 = vld [vmem:[#allocation7 + $0x190] sm:$0xff]
    %v275 = vld [vmem:[#allocation7 + $0x198] sm:$0xff]
    %v276 = vld [vmem:[#allocation7 + $0x1a0] sm:$0xf]
    %v277 = vld [vmem:[#allocation7 + $0x1a4] sm:$0xff]
    %v278 = vld [vmem:[#allocation7 + $0x1ac] sm:$0xff]
    %v279 = vld [vmem:[#allocation7 + $0x1b4] sm:$0xff]
    %v280 = vld [vmem:[#allocation7 + $0x1bc] sm:$0xf]
    %v281 = vld [vmem:[%s6] sm:$0xff]
    %v283 = vlaneseq
    %v284 = vshrl.u32 %v283, 7
    %v285 = vsub.s32 0, %v284
    %v286 = vrot.slane %v281, %v285
    %v287 = vlaneseq
    %v288 = vshrl.u32 %v287, 7
    %v289 = vsub.s32 1, %v288
    %v290 = vrot.slane %v281, %v289
    %v291 = vlaneseq
    %v292 = vshrl.u32 %v291, 7
    %v293 = vsub.s32 2, %v292
    %v294 = vrot.slane %v281, %v293
    %v295 = vlaneseq
    %v296 = vshrl.u32 %v295, 7
    %v297 = vsub.s32 3, %v296
    %v298 = vrot.slane %v281, %v297
    %v299 = vlaneseq
    %v300 = vshrl.u32 %v299, 7
    %v301 = vsub.s32 4, %v300
    %v302 = vrot.slane %v281, %v301
    %v303 = vlaneseq
    %v304 = vshrl.u32 %v303, 7
    %v305 = vsub.s32 5, %v304
    %v306 = vrot.slane %v281, %v305
    %v307 = vlaneseq
    %v308 = vshrl.u32 %v307, 7
    %v309 = vsub.s32 6, %v308
    %v310 = vrot.slane %v281, %v309
    %v382 = vunpack.c.l.b16 %v217
    %v383 = vunpack.c.h.b16 %v217
    %v384 = vunpack.c.l.b16 %v218
    %v385 = vunpack.c.h.b16 %v218
    %v386 = vunpack.c.l.b16 %v219
    %v387 = vunpack.c.h.b16 %v219
    %v388 = vunpack.c.l.b16 %v220
    %v389 = vunpack.c.l.b16 %v221
    %v390 = vunpack.c.h.b16 %v221
    %v391 = vunpack.c.l.b16 %v222
    %v392 = vunpack.c.h.b16 %v222
    %v393 = vunpack.c.l.b16 %v223
    %v394 = vunpack.c.h.b16 %v223
    %v395 = vunpack.c.l.b16 %v224
    %v396 = vunpack.c.l.b16 %v225
    %v397 = vunpack.c.h.b16 %v225
    %v398 = vunpack.c.l.b16 %v226
    %v399 = vunpack.c.h.b16 %v226
    %v400 = vunpack.c.l.b16 %v227
    %v401 = vunpack.c.h.b16 %v227
    %v402 = vunpack.c.l.b16 %v228
    %v403 = vunpack.c.l.b16 %v229
    %v404 = vunpack.c.h.b16 %v229
    %v405 = vunpack.c.l.b16 %v230
    %v406 = vunpack.c.h.b16 %v230
    %v407 = vunpack.c.l.b16 %v231
    %v408 = vunpack.c.h.b16 %v231
    %v409 = vunpack.c.l.b16 %v232
    %v410 = vunpack.c.l.b16 %v233
    %v411 = vunpack.c.h.b16 %v233
    %v412 = vunpack.c.l.b16 %v234
    %v413 = vunpack.c.h.b16 %v234
    %v414 = vunpack.c.l.b16 %v235
    %v415 = vunpack.c.h.b16 %v235
    %v416 = vunpack.c.l.b16 %v236
    %v417 = vunpack.c.l.b16 %v237
    %v418 = vunpack.c.h.b16 %v237
    %v419 = vunpack.c.l.b16 %v238
    %v420 = vunpack.c.h.b16 %v238
    %v421 = vunpack.c.l.b16 %v239
    %v422 = vunpack.c.h.b16 %v239
    %v423 = vunpack.c.l.b16 %v240
    %v424 = vunpack.c.l.b16 %v241
    %v425 = vunpack.c.h.b16 %v241
    %v426 = vunpack.c.l.b16 %v242
    %v427 = vunpack.c.h.b16 %v242
    %v428 = vunpack.c.l.b16 %v243
    %v429 = vunpack.c.h.b16 %v243
    %v430 = vunpack.c.l.b16 %v244
    %v431 = vunpack.c.l.b16 %v245
    %v432 = vunpack.c.h.b16 %v245
    %v433 = vunpack.c.l.b16 %v246
    %v434 = vunpack.c.h.b16 %v246
    %v435 = vunpack.c.l.b16 %v247
    %v436 = vunpack.c.h.b16 %v247
    %v437 = vunpack.c.l.b16 %v248
    %v438 = vunpack.c.l.b16 %v249
    %v439 = vunpack.c.h.b16 %v249
    %v440 = vunpack.c.l.b16 %v250
    %v441 = vunpack.c.h.b16 %v250
    %v442 = vunpack.c.l.b16 %v251
    %v443 = vunpack.c.h.b16 %v251
    %v444 = vunpack.c.l.b16 %v252
    %v445 = vunpack.c.l.b16 %v253
    %v446 = vunpack.c.h.b16 %v253
    %v447 = vunpack.c.l.b16 %v254
    %v448 = vunpack.c.h.b16 %v254
    %v449 = vunpack.c.l.b16 %v255
    %v450 = vunpack.c.h.b16 %v255
    %v451 = vunpack.c.l.b16 %v256
    %v452 = vunpack.c.l.b16 %v257
    %v453 = vunpack.c.h.b16 %v257
    %v454 = vunpack.c.l.b16 %v258
    %v455 = vunpack.c.h.b16 %v258
    %v456 = vunpack.c.l.b16 %v259
    %v457 = vunpack.c.h.b16 %v259
    %v458 = vunpack.c.l.b16 %v260
    %v459 = vunpack.c.l.b16 %v261
    %v460 = vunpack.c.h.b16 %v261
    %v461 = vunpack.c.l.b16 %v262
    %v462 = vunpack.c.h.b16 %v262
    %v463 = vunpack.c.l.b16 %v263
    %v464 = vunpack.c.h.b16 %v263
    %v465 = vunpack.c.l.b16 %v264
    %v466 = vunpack.c.l.b16 %v265
    %v467 = vunpack.c.h.b16 %v265
    %v468 = vunpack.c.l.b16 %v266
    %v469 = vunpack.c.h.b16 %v266
    %v470 = vunpack.c.l.b16 %v267
    %v471 = vunpack.c.h.b16 %v267
    %v472 = vunpack.c.l.b16 %v268
    %v473 = vunpack.c.l.b16 %v269
    %v474 = vunpack.c.h.b16 %v269
    %v475 = vunpack.c.l.b16 %v270
    %v476 = vunpack.c.h.b16 %v270
    %v477 = vunpack.c.l.b16 %v271
    %v478 = vunpack.c.h.b16 %v271
    %v479 = vunpack.c.l.b16 %v272
    %v480 = vunpack.c.l.b16 %v273
    %v481 = vunpack.c.h.b16 %v273
    %v482 = vunpack.c.l.b16 %v274
    %v483 = vunpack.c.h.b16 %v274
    %v484 = vunpack.c.l.b16 %v275
    %v485 = vunpack.c.h.b16 %v275
    %v486 = vunpack.c.l.b16 %v276
    %v487 = vunpack.c.l.b16 %v277
    %v488 = vunpack.c.h.b16 %v277
    %v489 = vunpack.c.l.b16 %v278
    %v490 = vunpack.c.h.b16 %v278
    %v491 = vunpack.c.l.b16 %v279
    %v492 = vunpack.c.h.b16 %v279
    %v493 = vunpack.c.l.b16 %v280
    %v494 = vpack.c.b16 %v389, %v382
    %v495 = vpack.c.b16 %v390, %v383
    %v496 = vpack.c.b16 %v391, %v384
    %v497 = vpack.c.b16 %v392, %v385
    %v498 = vpack.c.b16 %v393, %v386
    %v499 = vpack.c.b16 %v394, %v387
    %v500 = vpack.c.b16 %v395, %v388
    %v501 = vpack.c.b16 %v403, %v396
    %v502 = vpack.c.b16 %v404, %v397
    %v503 = vpack.c.b16 %v405, %v398
    %v504 = vpack.c.b16 %v406, %v399
    %v505 = vpack.c.b16 %v407, %v400
    %v506 = vpack.c.b16 %v408, %v401
    %v507 = vpack.c.b16 %v409, %v402
    %v508 = vpack.c.b16 %v417, %v410
    %v509 = vpack.c.b16 %v418, %v411
    %v510 = vpack.c.b16 %v419, %v412
    %v511 = vpack.c.b16 %v420, %v413
    %v512 = vpack.c.b16 %v421, %v414
    %v513 = vpack.c.b16 %v422, %v415
    %v514 = vpack.c.b16 %v423, %v416
    %v515 = vpack.c.b16 %v431, %v424
    %v516 = vpack.c.b16 %v432, %v425
    %v517 = vpack.c.b16 %v433, %v426
    %v518 = vpack.c.b16 %v434, %v427
    %v519 = vpack.c.b16 %v435, %v428
    %v520 = vpack.c.b16 %v436, %v429
    %v521 = vpack.c.b16 %v437, %v430
    %v522 = vpack.c.b16 %v445, %v438
    %v523 = vpack.c.b16 %v446, %v439
    %v524 = vpack.c.b16 %v447, %v440
    %v525 = vpack.c.b16 %v448, %v441
    %v526 = vpack.c.b16 %v449, %v442
    %v527 = vpack.c.b16 %v450, %v443
    %v528 = vpack.c.b16 %v451, %v444
    %v529 = vpack.c.b16 %v459, %v452
    %v530 = vpack.c.b16 %v460, %v453
    %v531 = vpack.c.b16 %v461, %v454
    %v532 = vpack.c.b16 %v462, %v455
    %v533 = vpack.c.b16 %v463, %v456
    %v534 = vpack.c.b16 %v464, %v457
    %v535 = vpack.c.b16 %v465, %v458
    %v536 = vpack.c.b16 %v473, %v466
    %v537 = vpack.c.b16 %v474, %v467
    %v538 = vpack.c.b16 %v475, %v468
    %v539 = vpack.c.b16 %v476, %v469
    %v540 = vpack.c.b16 %v477, %v470
    %v541 = vpack.c.b16 %v478, %v471
    %v542 = vpack.c.b16 %v479, %v472
    %v543 = vpack.c.b16 %v487, %v480
    %v544 = vpack.c.b16 %v488, %v481
    %v545 = vpack.c.b16 %v489, %v482
    %v546 = vpack.c.b16 %v490, %v483
    %v547 = vpack.c.b16 %v491, %v484
    %v548 = vpack.c.b16 %v492, %v485
    %v549 = vpack.c.b16 %v493, %v486
    %606 = vmatprep.subr.bf16.mxu0 %v495
    %607 = vmatpush1.bf16.msra.mxu0 %v494
    %608 = vmatprep.subr.bf16.mxu0 %v502
    %609 = vmatpush1.bf16.msra.mxu0 %v501
    %610 = vmatprep.subr.bf16.mxu0 %v509
    %611 = vmatpush1.bf16.msra.mxu0 %v508
    %612 = vmatprep.subr.bf16.mxu0 %v516
    %613 = vmatpush1.bf16.msra.mxu0 %v515
    %614 = vmatprep.subr.bf16.mxu0 %v523
    %615 = vmatpush1.bf16.msra.mxu0 %v522
    %616 = vmatprep.subr.bf16.mxu0 %v530
    %617 = vmatpush1.bf16.msra.mxu0 %v529
    %618 = vmatprep.subr.bf16.mxu0 %v537
    %619 = vmatpush1.bf16.msra.mxu0 %v536
    %620 = vmatprep.subr.bf16.mxu0 %v544
    %621 = vmatpush1.bf16.msra.mxu0 %v543
    %622 = vmatprep.subr.bf16.mxu0 0
    %623 = vmatpush1.bf16.msra.mxu0 0
    %624 = vmatprep.subr.bf16.mxu0 0
    %625 = vmatpush1.bf16.msra.mxu0 0
    %626 = vmatprep.subr.bf16.mxu0 0
    %627 = vmatpush1.bf16.msra.mxu0 0
    %628 = vmatprep.subr.bf16.mxu0 0
    %629 = vmatpush1.bf16.msra.mxu0 0
    %630 = vmatprep.subr.bf16.mxu0 0
    %631 = vmatpush1.bf16.msra.mxu0 0
    %632 = vmatprep.subr.bf16.mxu0 0
    %633 = vmatpush1.bf16.msra.mxu0 0
    %634 = vmatprep.subr.bf16.mxu0 0
    %635 = vmatpush1.bf16.msra.mxu0 0
    %636 = vmatprep.subr.bf16.mxu0 0
    %637 = vmatpush1.bf16.msra.mxu0 0
    %638 = vmatprep.mubr.bf16.mxu0 0
    %639 = vmatmul.mubr.bf16.gmra.mrb[0].mxu0 %v216
    %v640 = vpop.f32.mrb[0].mxu0
    %v641 = vadd.f32 %v286, %v640
    %v642 = vpop.f32.mrb[0].mxu0
    %v643 = vadd.f32 %v290, %v642
    %v644 = vpop.f32.mrb[0].mxu0
    %v645 = vpop.f32.mrb[0].mxu0
    %646 = vdwg.mxu0
    %647 = vmatprep.subr.bf16.mxu0 %v497
    %648 = vmatpush1.bf16.msra.mxu0 %v496
    %649 = vmatprep.subr.bf16.mxu0 %v504
    %650 = vmatpush1.bf16.msra.mxu0 %v503
    %651 = vmatprep.subr.bf16.mxu0 %v511
    %652 = vmatpush1.bf16.msra.mxu0 %v510
    %653 = vmatprep.subr.bf16.mxu0 %v518
    %654 = vmatpush1.bf16.msra.mxu0 %v517
    %655 = vmatprep.subr.bf16.mxu0 %v525
    %656 = vmatpush1.bf16.msra.mxu0 %v524
    %657 = vmatprep.subr.bf16.mxu0 %v532
    %658 = vmatpush1.bf16.msra.mxu0 %v531
    %659 = vmatprep.subr.bf16.mxu0 %v539
    %660 = vmatpush1.bf16.msra.mxu0 %v538
    %661 = vmatprep.subr.bf16.mxu0 %v546
    %662 = vmatpush1.bf16.msra.mxu0 %v545
    %663 = vmatprep.subr.bf16.mxu0 0
    %664 = vmatpush1.bf16.msra.mxu0 0
    %665 = vmatprep.subr.bf16.mxu0 0
    %666 = vmatpush1.bf16.msra.mxu0 0
    %667 = vmatprep.subr.bf16.mxu0 0
    %668 = vmatpush1.bf16.msra.mxu0 0
    %669 = vmatprep.subr.bf16.mxu0 0
    %670 = vmatpush1.bf16.msra.mxu0 0
    %671 = vmatprep.subr.bf16.mxu0 0
    %672 = vmatpush1.bf16.msra.mxu0 0
    %673 = vmatprep.subr.bf16.mxu0 0
    %674 = vmatpush1.bf16.msra.mxu0 0
    %675 = vmatprep.subr.bf16.mxu0 0
    %676 = vmatpush1.bf16.msra.mxu0 0
    %677 = vmatprep.subr.bf16.mxu0 0
    %678 = vmatpush1.bf16.msra.mxu0 0
    %679 = vmatprep.mubr.bf16.mxu0 0
    %680 = vmatmul.mubr.bf16.gmra.mrb[0].mxu0 %v216
    %v681 = vpop.f32.mrb[0].mxu0
    %v682 = vadd.f32 %v294, %v681
    %v683 = vpop.f32.mrb[0].mxu0
    %v684 = vadd.f32 %v298, %v683
    %v685 = vpop.f32.mrb[0].mxu0
    %v686 = vpop.f32.mrb[0].mxu0
    %687 = vdwg.mxu0
    %688 = vmatprep.subr.bf16.mxu0 %v499
    %689 = vmatpush1.bf16.msra.mxu0 %v498
    %690 = vmatprep.subr.bf16.mxu0 %v506
    %691 = vmatpush1.bf16.msra.mxu0 %v505
    %692 = vmatprep.subr.bf16.mxu0 %v513
    %693 = vmatpush1.bf16.msra.mxu0 %v512
    %694 = vmatprep.subr.bf16.mxu0 %v520
    %695 = vmatpush1.bf16.msra.mxu0 %v519
    %696 = vmatprep.subr.bf16.mxu0 %v527
    %697 = vmatpush1.bf16.msra.mxu0 %v526
    %698 = vmatprep.subr.bf16.mxu0 %v534
    %699 = vmatpush1.bf16.msra.mxu0 %v533
    %700 = vmatprep.subr.bf16.mxu0 %v541
    %701 = vmatpush1.bf16.msra.mxu0 %v540
    %702 = vmatprep.subr.bf16.mxu0 %v548
    %703 = vmatpush1.bf16.msra.mxu0 %v547
    %704 = vmatprep.subr.bf16.mxu0 0
    %705 = vmatpush1.bf16.msra.mxu0 0
    %706 = vmatprep.subr.bf16.mxu0 0
    %707 = vmatpush1.bf16.msra.mxu0 0
    %708 = vmatprep.subr.bf16.mxu0 0
    %709 = vmatpush1.bf16.msra.mxu0 0
    %710 = vmatprep.subr.bf16.mxu0 0
    %711 = vmatpush1.bf16.msra.mxu0 0
    %712 = vmatprep.subr.bf16.mxu0 0
    %713 = vmatpush1.bf16.msra.mxu0 0
    %714 = vmatprep.subr.bf16.mxu0 0
    %715 = vmatpush1.bf16.msra.mxu0 0
    %716 = vmatprep.subr.bf16.mxu0 0
    %717 = vmatpush1.bf16.msra.mxu0 0
    %718 = vmatprep.subr.bf16.mxu0 0
    %719 = vmatpush1.bf16.msra.mxu0 0
    %720 = vmatprep.mubr.bf16.mxu0 0
    %721 = vmatmul.mubr.bf16.gmra.mrb[0].mxu0 %v216
    %v722 = vpop.f32.mrb[0].mxu0
    %v723 = vadd.f32 %v302, %v722
    %v724 = vpop.f32.mrb[0].mxu0
    %v725 = vadd.f32 %v306, %v724
    %v726 = vpop.f32.mrb[0].mxu0
    %v727 = vpop.f32.mrb[0].mxu0
    %728 = vdwg.mxu0
    %729 = vmatprep.subr.bf16.mxu0 0
    %730 = vmatpush1.bf16.msra.mxu0 %v500
    %731 = vmatprep.subr.bf16.mxu0 0
    %732 = vmatpush1.bf16.msra.mxu0 %v507
    %733 = vmatprep.subr.bf16.mxu0 0
    %734 = vmatpush1.bf16.msra.mxu0 %v514
    %735 = vmatprep.subr.bf16.mxu0 0
    %736 = vmatpush1.bf16.msra.mxu0 %v521
    %737 = vmatprep.subr.bf16.mxu0 0
    %738 = vmatpush1.bf16.msra.mxu0 %v528
    %739 = vmatprep.subr.bf16.mxu0 0
    %740 = vmatpush1.bf16.msra.mxu0 %v535
    %741 = vmatprep.subr.bf16.mxu0 0
    %742 = vmatpush1.bf16.msra.mxu0 %v542
    %743 = vmatprep.subr.bf16.mxu0 0
    %744 = vmatpush1.bf16.msra.mxu0 %v549
    %745 = vmatprep.subr.bf16.mxu0 0
    %746 = vmatpush1.bf16.msra.mxu0 0
    %747 = vmatprep.subr.bf16.mxu0 0
    %748 = vmatpush1.bf16.msra.mxu0 0
    %749 = vmatprep.subr.bf16.mxu0 0
    %750 = vmatpush1.bf16.msra.mxu0 0
    %751 = vmatprep.subr.bf16.mxu0 0
    %752 = vmatpush1.bf16.msra.mxu0 0
    %753 = vmatprep.subr.bf16.mxu0 0
    %754 = vmatpush1.bf16.msra.mxu0 0
    %755 = vmatprep.subr.bf16.mxu0 0
    %756 = vmatpush1.bf16.msra.mxu0 0
    %757 = vmatprep.subr.bf16.mxu0 0
    %758 = vmatpush1.bf16.msra.mxu0 0
    %759 = vmatprep.subr.bf16.mxu0 0
    %760 = vmatpush1.bf16.msra.mxu0 0
    %761 = vmatprep.mubr.bf16.mxu0 0
    %762 = vmatmul.mubr.bf16.gmra.mrb[0].mxu0 %v216
    %v763 = vpop.f32.mrb[0].mxu0
    %v764 = vadd.f32 %v310, %v763
    %v765 = vpop.f32.mrb[0].mxu0
    %v766 = vpop.f32.mrb[0].mxu0
    %v767 = vpop.f32.mrb[0].mxu0
    %768 = vdwg.mxu0
    %v769 = vxor.u32 %v641, 2147483648
    %v770 = vxor.u32 %v643, 2147483648
    %v771 = vxor.u32 %v682, 2147483648
    %v772 = vxor.u32 %v684, 2147483648
    %v773 = vxor.u32 %v723, 2147483648
    %v774 = vxor.u32 %v725, 2147483648
    %v775 = vxor.u32 %v764, 2147483648
    %v776 = vmul.f32 %v769, 1.442695
    %v777 = vpow.pop %v776
    %v778 = vmul.f32 %v770, 1.442695
    %v779 = vpow.pop %v778
    %v780 = vmul.f32 %v771, 1.442695
    %v781 = vpow.pop %v780
    %v782 = vmul.f32 %v772, 1.442695
    %v783 = vpow.pop %v782
    %v784 = vmul.f32 %v773, 1.442695
    %v785 = vpow.pop %v784
    %v786 = vmul.f32 %v774, 1.442695
    %v787 = vpow.pop %v786
    %v788 = vmul.f32 %v775, 1.442695
    %v789 = vpow.pop %v788
    %v790 = vadd.f32 %v777, 1.0
    %v791 = vadd.f32 %v779, 1.0
    %v792 = vadd.f32 %v781, 1.0
    %v793 = vadd.f32 %v783, 1.0
    %v794 = vadd.f32 %v785, 1.0
    %v795 = vadd.f32 %v787, 1.0
    %v796 = vadd.f32 %v789, 1.0
    %v797 = vrcp.pop %v790
    %v798 = vmul.f32 1.0, %v797
    %v799 = vrcp.pop %v791
    %v800 = vmul.f32 1.0, %v799
    %v801 = vrcp.pop %v792
    %v802 = vmul.f32 1.0, %v801
    %v803 = vrcp.pop %v793
    %v804 = vmul.f32 1.0, %v803
    %v805 = vrcp.pop %v794
    %v806 = vmul.f32 1.0, %v805
    %v807 = vrcp.pop %v795
    %v808 = vmul.f32 1.0, %v807
    %v809 = vrcp.pop %v796
    %v810 = vmul.f32 1.0, %v809
    %811 = vst [vmem:[#allocation8] sm:$0xff] %v798
    %812 = vst [vmem:[#allocation8 + $0x8] sm:$0xff] %v800
    %813 = vst [vmem:[#allocation8 + $0x10] sm:$0xff] %v802
    %814 = vst [vmem:[#allocation8 + $0x18] sm:$0xff] %v804
    %815 = vst [vmem:[#allocation8 + $0x20] sm:$0xff] %v806
    %816 = vst [vmem:[#allocation8 + $0x28] sm:$0xff] %v808
    %817 = vst [vmem:[#allocation8 + $0x30] sm:$0xff] %v810
    // Predicated region
    $region42: #{tpu_custom_call.1} parent=1 // pred_check
      _
    $region43: #{tpu_custom_call.1} parent=1 // pred_check_branch
      %819 = sbr.rel (0) target = $region45
    $region44: #{tpu_custom_call.1} parent=1 // pred_region
      %s821 = ssub.s32 896, 896
      %822 = vsyncadd [#allocation4], %s821
      %s824 = sshll.u32 [#allocation8], 4
      %s825 = int_to_ptr.vmem [resolvable:$true] %s824
      %827 = dma.vmem_to_hbm [thread:$0]  %s825, 896, %s7, [#allocation4]
    $region45: #{tpu_custom_call.1} parent=1 // pred_fallthru
      _
    // Predicated region
    $region46: #{tpu_custom_call.1} parent=1 // pred_check
      _
    $region47: #{tpu_custom_call.1} parent=1 // pred_check_branch
      %829 = sbr.rel (0) target = $region49
    $region48: #{tpu_custom_call.1} parent=1 // pred_region
      %830 = dma.done [#allocation4], 896
    $region49: #{tpu_custom_call.1} parent=1 // pred_fallthru
      _
    %831 = vsyncpa [#allocation3], 1
    %832 = vsyncpa [#allocation6], 1
    %833 = vsyncpa [#allocation4], 1

</llo_original>
